<compile_context>
chip_gen: v7x
topology: tpu7x:2x2x1
jax: 0.10.0
libtpu: 0.0.40
codegen_flags: <defaults>
</compile_context>

<pallas_src>
import functools

import jax
import jax.numpy as jnp
import numpy as np
from jax.experimental import pallas as pl
from jax.experimental.pallas import tpu as pltpu


def _gpt_embedding_kernel(scal_ref, ids_ref, wte_hbm, wpe_hbm, out_ref,
                          row_buf, wpe_buf, sems, *,
                          tile_s, seq_len, train, drop_p):
    """Processes one (seq-tile j, batch b) output block of shape (1, tile_s, H)."""
    j = pl.program_id(0)          # sequence tile  (parallel -> megacore split)
    b = pl.program_id(1)          # batch          (arbitrary -> wpe cached across it)
    n_b = pl.num_programs(1)

    past_length = scal_ref[0]
    seed = scal_ref[1]

    row_sem = sems.at[0]
    wpe_sem = sems.at[1]

    # ---- positional slice: wpe[past_length + j*tile_s : + tile_s, :] -> VMEM ----
    # Fetched only once per sequence tile (b == 0).  wpe_buf is scratch, so it
    # persists across the (sequential, "arbitrary") batch axis and later batch
    # iterations reuse it for free.
    pos_start = past_length + j * tile_s
    wpe_cp = pltpu.make_async_copy(
        wpe_hbm.at[pl.ds(pos_start, tile_s), :], wpe_buf, wpe_sem)

    @pl.when(b == 0)
    def _():
        wpe_cp.start()

    # ---- token row gather ------------------------------------------------------
    # Issue EVERY row DMA of the tile up front onto one shared semaphore; the DMA
    # engine keeps the whole tile's worth of bytes in flight (covers HBM latency
    # far better than a shallow in-flight window).
    base = b * seq_len + j * tile_s          # offset into the flattened ids array

    def issue(r):
        tok = ids_ref[base + r]                               # scalar read from SMEM
        pltpu.make_async_copy(
            wte_hbm.at[pl.ds(tok, 1), :],                     # (1, H) row in HBM
            row_buf.at[pl.ds(r, 1), :],                       # (1, H) slot in VMEM
            row_sem).start()

    if tile_s <= 64:
        # Trace-time unroll: straight-line descriptor issue, no loop overhead.
        for r in range(tile_s):
            issue(r)
    else:
        def issue_body(r, carry):
            issue(r)
            return carry
        jax.lax.fori_loop(0, tile_s, issue_body, 0, unroll=8)

    # Aggregate wait: DMA completion semaphores count *bytes*, so a single wait
    # whose destination is the whole row_buf (tile_s * H elements) consumes
    # exactly the sum of the tile_s per-row (1, H) copies issued above.  The src
    # slice here exists only to give the descriptor the right byte count
    # (requires vocab >= tile_s, asserted in the wrapper).
    pltpu.make_async_copy(
        wte_hbm.at[pl.ds(0, tile_s), :], row_buf, row_sem).wait()

    @pl.when(b == 0)
    def _():
        wpe_cp.wait()

    hidden = row_buf[...] + wpe_buf[...]                      # (tile_s, H)

    if train and drop_p > 0.0:
        # nn.Dropout(p) train mode: zero with prob p, scale survivors by 1/(1-p).
        # Per-tile seed so different grid tiles do not repeat the same mask.
        pltpu.prng_seed(seed + j * n_b + b)
        bits = pltpu.bitcast(pltpu.prng_random_bits(hidden.shape), jnp.uint32)
        thresh = jnp.uint32(min(int(drop_p * float(2 ** 32)), 2 ** 32 - 1))
        keep = bits >= thresh
        hidden = jnp.where(keep, hidden * (1.0 / (1.0 - drop_p)),
                           jnp.zeros_like(hidden))
    # TODO(synk): PyTorch's exact dropout RNG stream is not reproducible here;
    # eval-mode (identity) semantics match exactly.

    out_ref[0] = hidden.astype(out_ref.dtype)


def _pick_tile(seq_len, max_tile=1024):
    """Largest divisor of seq_len <= max_tile, preferring multiples of 8."""
    best = None
    for t in range(min(seq_len, max_tile), 0, -1):
        if seq_len % t == 0:
            if t % 8 == 0 or t == seq_len:
                return t
            if best is None:
                best = t
    return best or seq_len


def gpt_embedding(input_ids, wte, wpe, *, past_length=0,
                  drop_p=0.0, train=False, seed=0):
    """Pallas equivalent of GPTEmbedding.forward(input_ids, past_length)."""
    B, S = input_ids.shape
    V, H = wte.shape
    P, _ = wpe.shape
    itemsize = jnp.dtype(wte.dtype).itemsize

    # Tile size: as big as a conservative VMEM budget allows (fewer grid steps,
    # longer uninterrupted gather pipelines), capped at 1024.
    vmem_budget = 40 << 20
    max_tile_by_vmem = max(8, vmem_budget // (4 * H * itemsize))
    tile_s = _pick_tile(S, max_tile=min(1024, int(max_tile_by_vmem)))
    assert S % tile_s == 0
    assert V >= tile_s, "vocab must be >= tile_s (aggregate-wait descriptor)"
    if isinstance(past_length, int):
        assert past_length + S <= P, "positions exceed wpe table"

    # Runtime scalars (no recompile when past_length / seed change).
    scal = jnp.asarray([past_length, seed], dtype=jnp.int32)
    # Flatten ids to 1-D for SMEM prefetch (avoids 2-D SMEM row/col padding) and
    # clamp so a bad token id cannot drive an out-of-bounds HBM DMA.
    # TODO(synk): PyTorch nn.Embedding raises on out-of-range ids; here they clamp.
    ids = jnp.clip(input_ids.astype(jnp.int32), 0, V - 1).reshape(-1)

    kernel = functools.partial(
        _gpt_embedding_kernel,
        tile_s=tile_s,
        seq_len=S,
        train=bool(train),
        drop_p=float(drop_p),
    )

    # VMEM from actual usage: row_buf + wpe_buf + double-buffered out tile + headroom.
    buf_bytes = tile_s * H * itemsize
    vmem_limit = int(min(48 << 20, max(16 << 20, 4 * buf_bytes + (4 << 20))))

    grid_spec = pltpu.PrefetchScalarGridSpec(
        num_scalar_prefetch=2,                  # scal, ids -> SMEM
        grid=(S // tile_s, B),                  # seq tiles outer, batch inner
        in_specs=[
            pl.BlockSpec(memory_space=pl.ANY),  # wte stays in HBM (row gather)
            pl.BlockSpec(memory_space=pl.ANY),  # wpe stays in HBM (sliced DMA)
        ],
        out_specs=pl.BlockSpec((1, tile_s, H),
                               lambda j, b, scal_ref, ids_ref: (b, j, 0)),
        scratch_shapes=[
            pltpu.VMEM((tile_s, H), wte.dtype),   # gathered token rows
            pltpu.VMEM((tile_s, H), wpe.dtype),   # positional slice (cached over b)
            pltpu.SemaphoreType.DMA((2,)),        # [0]=row gather, [1]=wpe slice
        ],
    )

    cost = pl.CostEstimate(
        flops=0,
        transcendentals=0,
        bytes_accessed=int(itemsize * (2 * B * S * H + S * H)),
    )

    return pl.pallas_call(
        kernel,
        out_shape=jax.ShapeDtypeStruct((B, S, H), wte.dtype),
        grid_spec=grid_spec,
        compiler_params=pltpu.CompilerParams(
            # seq-tile axis parallel (v7x megacore); batch axis must stay
            # "arbitrary" so the cached wpe_buf scratch is reused in order.
            dimension_semantics=("parallel", "arbitrary"),
            vmem_limit_bytes=vmem_limit,
        ),
        cost_estimate=cost,
    )(scal, ids, wte, wpe)


if __name__ == "__main__":
    B, S = 2, 8           # batch, sequence length
    V, P, H = 64, 32, 32  # vocab size, max positions, hidden size
    past_length = 3       # exercise the dynamic positional offset

    key = jax.random.PRNGKey(0)
    k_ids, k_wte, k_wpe = jax.random.split(key, 3)

    input_ids = jax.random.randint(k_ids, (B, S), 0, V, dtype=jnp.int32)
    wte = jax.random.normal(k_wte, (V, H), dtype=jnp.float32) * 0.02
    wpe = jax.random.normal(k_wpe, (P, H), dtype=jnp.float32) * 0.02

    out = gpt_embedding(input_ids, wte, wpe, past_length=past_length,
                        drop_p=0.1, train=False)
    out = jax.block_until_ready(out)

    # Reference (eval-mode dropout == identity), matches the PyTorch forward.
    positions = jnp.arange(past_length, S + past_length)
    ref = wte[input_ids] + wpe[positions][None, :, :]

    assert out.shape == (B, S, H) and out.dtype == jnp.float32
    np.testing.assert_allclose(np.asarray(out), np.asarray(ref),
                               rtol=1e-5, atol=1e-5)
    print("KERNEL_OK")
</pallas_src>

<mosaic_0001>
module attributes {stable_mosaic.version = 11 : i64} {
  func.func @_gpt_embedding_kernel(%arg0: i32, %arg1: i32, %arg2: memref<2xi32, #tpu.memory_space<smem>>, %arg3: memref<16xi32, #tpu.memory_space<smem>>, %arg4: memref<64x32xf32, #tpu.memory_space<any>>, %arg5: memref<32x32xf32, #tpu.memory_space<any>>, %arg6: memref<1x8x32xf32, #tpu.memory_space<vmem>>, %arg7: memref<8x32xf32, #tpu.memory_space<vmem>>, %arg8: memref<8x32xf32, #tpu.memory_space<vmem>>, %arg9: memref<2x!tpu.dma_semaphore, #tpu.memory_space<semaphore_mem>>) attributes {dimension_semantics = [#tpu.dimension_semantics<parallel>, #tpu.dimension_semantics<arbitrary>], iteration_bounds = array<i64: 1, 2>, scalar_prefetch = 2 : i64, scratch_operands = 3 : i64, tpu.core_type = #tpu.core_type<tc>, window_params = [{}, {}, {transform_indices = @transform_2, window_bounds = array<i64: 1, 8, 32>}]} {
    %c0 = arith.constant 0 : index
    %0 = memref.load %arg2[%c0] : memref<2xi32, #tpu.memory_space<smem>>
    %c8_i32 = arith.constant 8 : i32
    %1 = arith.muli %arg0, %c8_i32 : i32
    %2 = arith.addi %0, %1 : i32
    %c0_i32 = arith.constant 0 : i32
    %3 = arith.cmpi eq, %arg1, %c0_i32 : i32
    %4 = arith.extui %3 : i1 to i32
    %c1_i32 = arith.constant 1 : i32
    %c0_i32_0 = arith.constant 0 : i32
    %5 = arith.cmpi ne, %4, %c0_i32_0 : i32
    scf.if %5 {
      %c0_i32_50 = arith.constant 0 : i32
      %77 = tpu.memref_slice %arg5[%2, %c0_i32_50] : memref<32x32xf32, #tpu.memory_space<any>> -> memref<8x32xf32, #tpu.memory_space<any>>
      %78 = tpu.memref_slice %arg9[%c1_i32] : memref<2x!tpu.dma_semaphore, #tpu.memory_space<semaphore_mem>> -> memref<1x!tpu.dma_semaphore, #tpu.memory_space<semaphore_mem>>
      %79 = tpu.memref_squeeze %78 : memref<1x!tpu.dma_semaphore, #tpu.memory_space<semaphore_mem>> -> memref<!tpu.dma_semaphore, #tpu.memory_space<semaphore_mem>>
      tpu.enqueue_dma source(%77 : memref<8x32xf32, #tpu.memory_space<any>>) target(%arg8 : memref<8x32xf32, #tpu.memory_space<vmem>>) target_semaphore(%79 : memref<!tpu.dma_semaphore, #tpu.memory_space<semaphore_mem>>)
    } else {
    }
    %c8_i32_1 = arith.constant 8 : i32
    %6 = arith.muli %arg1, %c8_i32_1 : i32
    %c8_i32_2 = arith.constant 8 : i32
    %7 = arith.muli %arg0, %c8_i32_2 : i32
    %8 = arith.addi %6, %7 : i32
    %c0_i32_3 = arith.constant 0 : i32
    %9 = arith.addi %8, %c0_i32_3 : i32
    %10 = arith.index_cast %9 : i32 to index
    %11 = memref.load %arg3[%10] : memref<16xi32, #tpu.memory_space<smem>>
    %c0_i32_4 = arith.constant 0 : i32
    %c0_i32_5 = arith.constant 0 : i32
    %12 = tpu.memref_slice %arg4[%11, %c0_i32_5] : memref<64x32xf32, #tpu.memory_space<any>> -> memref<1x32xf32, #tpu.memory_space<any>>
    %c0_i32_6 = arith.constant 0 : i32
    %c0_i32_7 = arith.constant 0 : i32
    %13 = tpu.memref_slice %arg7[%c0_i32_6, %c0_i32_7] : memref<8x32xf32, #tpu.memory_space<vmem>> -> memref<1x32xf32, #tpu.memory_space<vmem>>
    %14 = tpu.memref_slice %arg9[%c0_i32_4] : memref<2x!tpu.dma_semaphore, #tpu.memory_space<semaphore_mem>> -> memref<1x!tpu.dma_semaphore, #tpu.memory_space<semaphore_mem>>
    %15 = tpu.memref_squeeze %14 : memref<1x!tpu.dma_semaphore, #tpu.memory_space<semaphore_mem>> -> memref<!tpu.dma_semaphore, #tpu.memory_space<semaphore_mem>>
    tpu.enqueue_dma source(%12 : memref<1x32xf32, #tpu.memory_space<any>>) target(%13 : memref<1x32xf32, #tpu.memory_space<vmem>>) target_semaphore(%15 : memref<!tpu.dma_semaphore, #tpu.memory_space<semaphore_mem>>)
    %c1_i32_8 = arith.constant 1 : i32
    %16 = arith.addi %8, %c1_i32_8 : i32
    %17 = arith.index_cast %16 : i32 to index
    %18 = memref.load %arg3[%17] : memref<16xi32, #tpu.memory_space<smem>>
    %c0_i32_9 = arith.constant 0 : i32
    %c0_i32_10 = arith.constant 0 : i32
    %19 = tpu.memref_slice %arg4[%18, %c0_i32_10] : memref<64x32xf32, #tpu.memory_space<any>> -> memref<1x32xf32, #tpu.memory_space<any>>
    %c1_i32_11 = arith.constant 1 : i32
    %c0_i32_12 = arith.constant 0 : i32
    %20 = tpu.memref_slice %arg7[%c1_i32_11, %c0_i32_12] : memref<8x32xf32, #tpu.memory_space<vmem>> -> memref<1x32xf32, #tpu.memory_space<vmem>>
    %21 = tpu.memref_slice %arg9[%c0_i32_9] : memref<2x!tpu.dma_semaphore, #tpu.memory_space<semaphore_mem>> -> memref<1x!tpu.dma_semaphore, #tpu.memory_space<semaphore_mem>>
    %22 = tpu.memref_squeeze %21 : memref<1x!tpu.dma_semaphore, #tpu.memory_space<semaphore_mem>> -> memref<!tpu.dma_semaphore, #tpu.memory_space<semaphore_mem>>
    tpu.enqueue_dma source(%19 : memref<1x32xf32, #tpu.memory_space<any>>) target(%20 : memref<1x32xf32, #tpu.memory_space<vmem>>) target_semaphore(%22 : memref<!tpu.dma_semaphore, #tpu.memory_space<semaphore_mem>>)
    %c2_i32 = arith.constant 2 : i32
    %23 = arith.addi %8, %c2_i32 : i32
    %24 = arith.index_cast %23 : i32 to index
    %25 = memref.load %arg3[%24] : memref<16xi32, #tpu.memory_space<smem>>
    %c0_i32_13 = arith.constant 0 : i32
    %c0_i32_14 = arith.constant 0 : i32
    %26 = tpu.memref_slice %arg4[%25, %c0_i32_14] : memref<64x32xf32, #tpu.memory_space<any>> -> memref<1x32xf32, #tpu.memory_space<any>>
    %c2_i32_15 = arith.constant 2 : i32
    %c0_i32_16 = arith.constant 0 : i32
    %27 = tpu.memref_slice %arg7[%c2_i32_15, %c0_i32_16] : memref<8x32xf32, #tpu.memory_space<vmem>> -> memref<1x32xf32, #tpu.memory_space<vmem>>
    %28 = tpu.memref_slice %arg9[%c0_i32_13] : memref<2x!tpu.dma_semaphore, #tpu.memory_space<semaphore_mem>> -> memref<1x!tpu.dma_semaphore, #tpu.memory_space<semaphore_mem>>
    %29 = tpu.memref_squeeze %28 : memref<1x!tpu.dma_semaphore, #tpu.memory_space<semaphore_mem>> -> memref<!tpu.dma_semaphore, #tpu.memory_space<semaphore_mem>>
    tpu.enqueue_dma source(%26 : memref<1x32xf32, #tpu.memory_space<any>>) target(%27 : memref<1x32xf32, #tpu.memory_space<vmem>>) target_semaphore(%29 : memref<!tpu.dma_semaphore, #tpu.memory_space<semaphore_mem>>)
    %c3_i32 = arith.constant 3 : i32
    %30 = arith.addi %8, %c3_i32 : i32
    %31 = arith.index_cast %30 : i32 to index
    %32 = memref.load %arg3[%31] : memref<16xi32, #tpu.memory_space<smem>>
    %c0_i32_17 = arith.constant 0 : i32
    %c0_i32_18 = arith.constant 0 : i32
    %33 = tpu.memref_slice %arg4[%32, %c0_i32_18] : memref<64x32xf32, #tpu.memory_space<any>> -> memref<1x32xf32, #tpu.memory_space<any>>
    %c3_i32_19 = arith.constant 3 : i32
    %c0_i32_20 = arith.constant 0 : i32
    %34 = tpu.memref_slice %arg7[%c3_i32_19, %c0_i32_20] : memref<8x32xf32, #tpu.memory_space<vmem>> -> memref<1x32xf32, #tpu.memory_space<vmem>>
    %35 = tpu.memref_slice %arg9[%c0_i32_17] : memref<2x!tpu.dma_semaphore, #tpu.memory_space<semaphore_mem>> -> memref<1x!tpu.dma_semaphore, #tpu.memory_space<semaphore_mem>>
    %36 = tpu.memref_squeeze %35 : memref<1x!tpu.dma_semaphore, #tpu.memory_space<semaphore_mem>> -> memref<!tpu.dma_semaphore, #tpu.memory_space<semaphore_mem>>
    tpu.enqueue_dma source(%33 : memref<1x32xf32, #tpu.memory_space<any>>) target(%34 : memref<1x32xf32, #tpu.memory_space<vmem>>) target_semaphore(%36 : memref<!tpu.dma_semaphore, #tpu.memory_space<semaphore_mem>>)
    %c4_i32 = arith.constant 4 : i32
    %37 = arith.addi %8, %c4_i32 : i32
    %38 = arith.index_cast %37 : i32 to index
    %39 = memref.load %arg3[%38] : memref<16xi32, #tpu.memory_space<smem>>
    %c0_i32_21 = arith.constant 0 : i32
    %c0_i32_22 = arith.constant 0 : i32
    %40 = tpu.memref_slice %arg4[%39, %c0_i32_22] : memref<64x32xf32, #tpu.memory_space<any>> -> memref<1x32xf32, #tpu.memory_space<any>>
    %c4_i32_23 = arith.constant 4 : i32
    %c0_i32_24 = arith.constant 0 : i32
    %41 = tpu.memref_slice %arg7[%c4_i32_23, %c0_i32_24] : memref<8x32xf32, #tpu.memory_space<vmem>> -> memref<1x32xf32, #tpu.memory_space<vmem>>
    %42 = tpu.memref_slice %arg9[%c0_i32_21] : memref<2x!tpu.dma_semaphore, #tpu.memory_space<semaphore_mem>> -> memref<1x!tpu.dma_semaphore, #tpu.memory_space<semaphore_mem>>
    %43 = tpu.memref_squeeze %42 : memref<1x!tpu.dma_semaphore, #tpu.memory_space<semaphore_mem>> -> memref<!tpu.dma_semaphore, #tpu.memory_space<semaphore_mem>>
    tpu.enqueue_dma source(%40 : memref<1x32xf32, #tpu.memory_space<any>>) target(%41 : memref<1x32xf32, #tpu.memory_space<vmem>>) target_semaphore(%43 : memref<!tpu.dma_semaphore, #tpu.memory_space<semaphore_mem>>)
    %c5_i32 = arith.constant 5 : i32
    %44 = arith.addi %8, %c5_i32 : i32
    %45 = arith.index_cast %44 : i32 to index
    %46 = memref.load %arg3[%45] : memref<16xi32, #tpu.memory_space<smem>>
    %c0_i32_25 = arith.constant 0 : i32
    %c0_i32_26 = arith.constant 0 : i32
    %47 = tpu.memref_slice %arg4[%46, %c0_i32_26] : memref<64x32xf32, #tpu.memory_space<any>> -> memref<1x32xf32, #tpu.memory_space<any>>
    %c5_i32_27 = arith.constant 5 : i32
    %c0_i32_28 = arith.constant 0 : i32
    %48 = tpu.memref_slice %arg7[%c5_i32_27, %c0_i32_28] : memref<8x32xf32, #tpu.memory_space<vmem>> -> memref<1x32xf32, #tpu.memory_space<vmem>>
    %49 = tpu.memref_slice %arg9[%c0_i32_25] : memref<2x!tpu.dma_semaphore, #tpu.memory_space<semaphore_mem>> -> memref<1x!tpu.dma_semaphore, #tpu.memory_space<semaphore_mem>>
    %50 = tpu.memref_squeeze %49 : memref<1x!tpu.dma_semaphore, #tpu.memory_space<semaphore_mem>> -> memref<!tpu.dma_semaphore, #tpu.memory_space<semaphore_mem>>
    tpu.enqueue_dma source(%47 : memref<1x32xf32, #tpu.memory_space<any>>) target(%48 : memref<1x32xf32, #tpu.memory_space<vmem>>) target_semaphore(%50 : memref<!tpu.dma_semaphore, #tpu.memory_space<semaphore_mem>>)
    %c6_i32 = arith.constant 6 : i32
    %51 = arith.addi %8, %c6_i32 : i32
    %52 = arith.index_cast %51 : i32 to index
    %53 = memref.load %arg3[%52] : memref<16xi32, #tpu.memory_space<smem>>
    %c0_i32_29 = arith.constant 0 : i32
    %c0_i32_30 = arith.constant 0 : i32
    %54 = tpu.memref_slice %arg4[%53, %c0_i32_30] : memref<64x32xf32, #tpu.memory_space<any>> -> memref<1x32xf32, #tpu.memory_space<any>>
    %c6_i32_31 = arith.constant 6 : i32
    %c0_i32_32 = arith.constant 0 : i32
    %55 = tpu.memref_slice %arg7[%c6_i32_31, %c0_i32_32] : memref<8x32xf32, #tpu.memory_space<vmem>> -> memref<1x32xf32, #tpu.memory_space<vmem>>
    %56 = tpu.memref_slice %arg9[%c0_i32_29] : memref<2x!tpu.dma_semaphore, #tpu.memory_space<semaphore_mem>> -> memref<1x!tpu.dma_semaphore, #tpu.memory_space<semaphore_mem>>
    %57 = tpu.memref_squeeze %56 : memref<1x!tpu.dma_semaphore, #tpu.memory_space<semaphore_mem>> -> memref<!tpu.dma_semaphore, #tpu.memory_space<semaphore_mem>>
    tpu.enqueue_dma source(%54 : memref<1x32xf32, #tpu.memory_space<any>>) target(%55 : memref<1x32xf32, #tpu.memory_space<vmem>>) target_semaphore(%57 : memref<!tpu.dma_semaphore, #tpu.memory_space<semaphore_mem>>)
    %c7_i32 = arith.constant 7 : i32
    %58 = arith.addi %8, %c7_i32 : i32
    %59 = arith.index_cast %58 : i32 to index
    %60 = memref.load %arg3[%59] : memref<16xi32, #tpu.memory_space<smem>>
    %c0_i32_33 = arith.constant 0 : i32
    %c0_i32_34 = arith.constant 0 : i32
    %61 = tpu.memref_slice %arg4[%60, %c0_i32_34] : memref<64x32xf32, #tpu.memory_space<any>> -> memref<1x32xf32, #tpu.memory_space<any>>
    %c7_i32_35 = arith.constant 7 : i32
    %c0_i32_36 = arith.constant 0 : i32
    %62 = tpu.memref_slice %arg7[%c7_i32_35, %c0_i32_36] : memref<8x32xf32, #tpu.memory_space<vmem>> -> memref<1x32xf32, #tpu.memory_space<vmem>>
    %63 = tpu.memref_slice %arg9[%c0_i32_33] : memref<2x!tpu.dma_semaphore, #tpu.memory_space<semaphore_mem>> -> memref<1x!tpu.dma_semaphore, #tpu.memory_space<semaphore_mem>>
    %64 = tpu.memref_squeeze %63 : memref<1x!tpu.dma_semaphore, #tpu.memory_space<semaphore_mem>> -> memref<!tpu.dma_semaphore, #tpu.memory_space<semaphore_mem>>
    tpu.enqueue_dma source(%61 : memref<1x32xf32, #tpu.memory_space<any>>) target(%62 : memref<1x32xf32, #tpu.memory_space<vmem>>) target_semaphore(%64 : memref<!tpu.dma_semaphore, #tpu.memory_space<semaphore_mem>>)
    %c0_i32_37 = arith.constant 0 : i32
    %c0_i32_38 = arith.constant 0 : i32
    %c0_i32_39 = arith.constant 0 : i32
    %65 = tpu.memref_slice %arg4[%c0_i32_38, %c0_i32_39] : memref<64x32xf32, #tpu.memory_space<any>> -> memref<8x32xf32, #tpu.memory_space<any>>
    %66 = tpu.memref_slice %arg9[%c0_i32_37] : memref<2x!tpu.dma_semaphore, #tpu.memory_space<semaphore_mem>> -> memref<1x!tpu.dma_semaphore, #tpu.memory_space<semaphore_mem>>
    %67 = tpu.memref_squeeze %66 : memref<1x!tpu.dma_semaphore, #tpu.memory_space<semaphore_mem>> -> memref<!tpu.dma_semaphore, #tpu.memory_space<semaphore_mem>>
    tpu.wait_dma2 semaphore(%67 : memref<!tpu.dma_semaphore, #tpu.memory_space<semaphore_mem>>) src(%65 : memref<8x32xf32, #tpu.memory_space<any>>) dst(%arg7 : memref<8x32xf32, #tpu.memory_space<vmem>>)
    %c0_i32_40 = arith.constant 0 : i32
    %68 = arith.cmpi eq, %arg1, %c0_i32_40 : i32
    %69 = arith.extui %68 : i1 to i32
    %c1_i32_41 = arith.constant 1 : i32
    %c0_i32_42 = arith.constant 0 : i32
    %70 = arith.cmpi ne, %69, %c0_i32_42 : i32
    scf.if %70 {
      %c0_i32_50 = arith.constant 0 : i32
      %77 = tpu.memref_slice %arg5[%2, %c0_i32_50] : memref<32x32xf32, #tpu.memory_space<any>> -> memref<8x32xf32, #tpu.memory_space<any>>
      %78 = tpu.memref_slice %arg9[%c1_i32_41] : memref<2x!tpu.dma_semaphore, #tpu.memory_space<semaphore_mem>> -> memref<1x!tpu.dma_semaphore, #tpu.memory_space<semaphore_mem>>
      %79 = tpu.memref_squeeze %78 : memref<1x!tpu.dma_semaphore, #tpu.memory_space<semaphore_mem>> -> memref<!tpu.dma_semaphore, #tpu.memory_space<semaphore_mem>>
      tpu.wait_dma2 semaphore(%79 : memref<!tpu.dma_semaphore, #tpu.memory_space<semaphore_mem>>) src(%77 : memref<8x32xf32, #tpu.memory_space<any>>) dst(%arg8 : memref<8x32xf32, #tpu.memory_space<vmem>>)
    } else {
    }
    %c0_43 = arith.constant 0 : index
    %c0_44 = arith.constant 0 : index
    %71 = vector.load %arg7[%c0_43, %c0_44] : memref<8x32xf32, #tpu.memory_space<vmem>>, vector<8x32xf32>
    %c0_45 = arith.constant 0 : index
    %c0_46 = arith.constant 0 : index
    %72 = vector.load %arg8[%c0_45, %c0_46] : memref<8x32xf32, #tpu.memory_space<vmem>>, vector<8x32xf32>
    %73 = arith.addf %71, %72 : vector<8x32xf32>
    %c0_47 = arith.constant 0 : index
    %c0_48 = arith.constant 0 : index
    %c0_49 = arith.constant 0 : index
    %74 = vector.load %arg6[%c0_47, %c0_48, %c0_49] : memref<1x8x32xf32, #tpu.memory_space<vmem>>, vector<1x8x32xf32>
    %75 = vector.shape_cast %74 : vector<1x8x32xf32> to vector<8x32xf32>
    %76 = vector.shape_cast %73 : vector<8x32xf32> to vector<1x8x32xf32>
    tpu.vector_store %arg6[%c0_47, %c0_48, %c0_49], %76 {strides = array<i32>} : memref<1x8x32xf32, #tpu.memory_space<vmem>>, vector<1x8x32xf32>,
    return
  }
  func.func @transform_2(%arg0: i32, %arg1: i32, %arg2: memref<2xi32, #tpu.memory_space<smem>>, %arg3: memref<16xi32, #tpu.memory_space<smem>>) -> (i32, i32, i32) {
    %c0_i32 = arith.constant 0 : i32
    %c0_i32_0 = arith.constant 0 : i32
    return %arg1, %arg0, %c0_i32 : i32, i32, i32
  }
}

</mosaic_0001>

<llo_original>
// kernel: tpu_custom_call.1
$region0: #{tpu_custom_call.1}
  #allocation0 [shape = 'u32[]', space=smem, size = 0x4, offset = 0x4, fixed_abs, tag = 'smem constant byte address 0x4 - core index']
  #allocation1 [shape = 'u32[144,128]{1,0:T(1,128)}', space=vmem, size = 0x12000, scoped, tag = 'internal scratch']
  #allocation2 [shape = 'f32[8,32]{1,0:T(8,128)}', space=vmem, size = 0x1000, scoped, tag = 'scratch operand']
  #allocation3 [shape = 'f32[8,32]{1,0:T(8,128)}', space=vmem, size = 0x1000, scoped, tag = 'scratch operand']
  #allocation4 [shape = 's32[2]{0}', space=sflag, size = 0x8, scoped, tag = 'scratch operand']
  #allocation5 [shape = 's32[1]{0}', space=sflag, size = 0x4, scoped, tag = 'scoped memory for tpu_custom_call.1']
  #allocation6 [shape = 'u8[512]{0}', space=smem, size = 0x200, scoped, tag = 'prefetched SMEM operand 0']
  #allocation7 [shape = 'u8[512]{0}', space=smem, size = 0x200, scoped, tag = 'prefetched SMEM operand 1']
  #allocation10 [shape = 's32[]', space=sflag, size = 0x4, offset = 0, fixed_abs, tag = 'sflag constant byte address 0x0 - dummy sync flag']
  #allocation11 [shape = 's32[]', space=sflag, size = 0x4, offset = 0, fixed_abs, tag = 'sflag constant byte address 0x0 - dummy sync flag']
  #allocation12 [shape = 's32[]', space=sflag, size = 0x4, offset = 0, fixed_abs, tag = 'sflag constant byte address 0x0 - dummy sync flag']
  #allocation13 [shape = 's32[]', space=sflag, size = 0x4, offset = 0, fixed_abs, tag = 'sflag constant byte address 0x0 - dummy sync flag']
  #allocation14 [shape = 's32[]', space=sflag, size = 0x4, offset = 0, fixed_abs, tag = 'sflag constant byte address 0x0 - dummy sync flag']
  #allocation15 [shape = 's32[]', space=sflag, size = 0x4, offset = 0, fixed_abs, tag = 'sflag constant byte address 0x0 - dummy sync flag']
  #allocation16 [shape = 's32[]', space=sflag, size = 0x4, offset = 0, fixed_abs, tag = 'sflag constant byte address 0x0 - dummy sync flag']
  #allocation17 [shape = 's32[]', space=sflag, size = 0x4, offset = 0, fixed_abs, tag = 'sflag constant byte address 0x0 - dummy sync flag']
  #allocation18 [shape = 's32[]', space=sflag, size = 0x4, offset = 0, fixed_abs, tag = 'sflag constant byte address 0x0 - dummy sync flag']
  %s0 = inlined_call_operand.vmem [shape: s32[2], index: 0, kind: input, shape index: {}]
  %s1 = inlined_call_operand.vmem [shape: s32[16], index: 1, kind: input, shape index: {}]
  %s2 = inlined_call_operand.vmem [shape: f32[64,32], index: 2, kind: input, shape index: {}]
  %s3 = inlined_call_operand.vmem [shape: f32[32,32], index: 3, kind: input, shape index: {}]
  %s4 = inlined_call_operand.hbm [shape: f32[2,8,32], index: 4, kind: output, shape index: {}]
  %s5 = sld [smem:[#allocation0]]
  $region307: #{tpu_custom_call.1} parent=0
    _
  %s7 = ssub.s32 1, %s5
  %s8 = scalar_select 0, %s7, %s5
  %s9 = sshll.u32 %s0, 4
  %s10 = int_to_ptr.vmem [resolvable:$true] %s9
  %12 = dma.vmem_to_smem %s10, 16, [#allocation6], [#allocation5]
  %s13 = sshll.u32 %s1, 4
  %s14 = int_to_ptr.vmem [resolvable:$true] %s13
  %16 = dma.vmem_to_smem %s14, 16, [#allocation7], [#allocation5]
  %17 = dma.done [#allocation5], 32
  %18 = sfence
  $region1: #{tpu_custom_call.1} parent=0
    #allocation8 [shape = 'u8[8192]{0}', space=vmem, size = 0x2000, scoped, tag = 'output window, operand 0']
    #allocation9 [shape = 's32[2]{0}', space=sflag, size = 0x8, scoped, tag = 'scoped memory for tpu_custom_call.1']
    %19 = vsyncpa [#allocation9], 0
    %s20 = scalar_lea.sflag [#allocation9], 1
    %21 = vsyncpa %s20, 0
    loop: start=0, step=1, limit=3
    $region2: #{tpu_custom_call.1} parent=1 // loop_pre_header
      _
    $region3: #{tpu_custom_call.1} parent=1 // loop_header
      %s23 = sphi 0, %s27
      %p24 = scmp.ge.s32.totalorder %s23, 3
      %s29 = sphi 0, %s39
      %s30 = sphi 0, %s35
      %s31 = sphi 0, %s29
      %s32 = sphi 0, %s30
      %s44 = sphi 0, %s46
      %s47 = sphi 0, %s44
      %s57 = sphi 0, %s47
    $region4: #{tpu_custom_call.1} parent=1 // loop_header_branch
      %26 = sbr.rel (%p24) target = $region8
    $region5: #{tpu_custom_call.1} parent=1 // loop_body
      %s28 = ssub.s32 %s23, 1
      %s33 = sadd.s32 1, %s30
      %p34 = scmp.ge.s32.totalorder %s33, 2
      %s35 = scalar_select %p34, 0, %s33
      %s36 = sadd.s32 1, %s29
      %s37 = scalar_select %p34, %s36, %s29
      %p38 = scmp.ge.s32.totalorder %s37, 1
      %s39 = scalar_select %p38, 0, %s37
      %s40 = ssub.s32 %s30, %s35
      %s41 = ssub.s32 %s29, %s39
      %s42 = sor.u32 %s40, %s41
      %p43 = scmp.eq.s32.totalorder %s42, 0
      %s45 = sadd.s32 %s44, 1
      %s46 = scalar_select %p43, %s44, %s45
      %p48 = pneg %p43
      %p49 = scmp.eq.s32.totalorder %s23, 1
      %p50 = por %p48, %p49
      %p51 = scmp.ne.s32.totalorder %s44, %s47
      %p52 = scmp.eq.s32.totalorder %s23, 0
      %p53 = por %p51, %p52
      %p54 = scmp.ne.s32.totalorder %s44, %s47
      %p55 = scmp.eq.s32.totalorder %s28, 1
      %p56 = por %p54, %p55
      %p58 = scmp.ne.s32.totalorder %s47, %s57
      %p59 = scmp.eq.s32.totalorder %s28, 0
      %p60 = por %p58, %p59
      %p61 = scmp.lt.s32.totalorder %s23, 2
      // Predicated region
      $region9: #{tpu_custom_call.1} parent=5 // pred_check
        %p62 = pneg %p61
      $region10: #{tpu_custom_call.1} parent=5 // pred_check_branch
        %64 = sbr.rel (%p62) target = $region12
      $region11: #{tpu_custom_call.1} parent=5 // pred_region
        %p65 = pneg %p53
        %p66 = pneg %p50
        %s67 = sand.u32 %s44, 1
        %s68 = scalar_lea.sflag [#allocation9], %s67
        %s69 = sand.u32 %s44, 1
        %s70 = smul.addr %s69, 8
        %s71 = scalar_lea.vmem [#allocation8], %s70
        %s72 = sld [smem:[#allocation6]]
        %s73 = smul.u32 %s29, 8
        %s74 = sadd.s32 %s72, %s73
        %p75 = scmp.eq.s32.totalorder %s30, 0
        // Predicated region
        $region13: #{tpu_custom_call.1} parent=11 // pred_check
          %p76 = pneg %p75
        $region14: #{tpu_custom_call.1} parent=11 // pred_check_branch
          %78 = sbr.rel (%p76) target = $region16
        $region15: #{tpu_custom_call.1} parent=11 // pred_region
          %s79 = scalar_lea.vmem %s3, %s74
          %s80 = scalar_lea.sflag [#allocation4], 1
          %p82 = scmp.lt.u32.totalorder 8, 8
          %p83 = pneg %p82
          // Predicated region
          $region17: #{tpu_custom_call.1} parent=15 // pred_check
            _
          $region18: #{tpu_custom_call.1} parent=15 // pred_check_branch
            %85 = sbr.rel (%p82) target = $region20
          $region19: #{tpu_custom_call.1} parent=15 // pred_region
            %s100 = sand.u32 8, 7
            %p101 = scmp.eq.s32.totalorder %s100, 0
            // Predicated region
            $region32: #{tpu_custom_call.1} parent=19 // pred_check
              %p102 = pneg %p101
            $region33: #{tpu_custom_call.1} parent=19 // pred_check_branch
              %104 = sbr.rel (%p102) target = $region35
            $region34: #{tpu_custom_call.1} parent=19 // pred_region
              loop: start=0, step=1, limit=1
              $region36: #{tpu_custom_call.1} parent=34 // loop_pre_header
                _
              $region37: #{tpu_custom_call.1} parent=34 // loop_header
                %s106 = sphi 0, %s110
                %p107 = scmp.ge.s32.totalorder %s106, 1
                %s111 = sphi %s79, %s79
                %s112 = sphi [#allocation3], [#allocation3]
              $region38: #{tpu_custom_call.1} parent=34 // loop_header_branch
                %109 = sbr.rel (%p107) target = $region42
              $region39: #{tpu_custom_call.1} parent=34 // loop_body
                %v113 = vld [vmem:[%s111] sm:$0xff]
                %114 = vst [vmem:[%s112] sm:$0xff] %v113
              $region40: #{tpu_custom_call.1} parent=34 // loop_footer
                %s110 = sadd.s32 1, %s106
              $region41: #{tpu_custom_call.1} parent=34 // loop_footer_branch
                %105 = sbr.rel target = $region37
              $region42: #{tpu_custom_call.1} parent=34 // loop_exit
                _
            $region35: #{tpu_custom_call.1} parent=19 // pred_fallthru
              _
            %p115 = pneg %p101
            // Predicated region
            $region43: #{tpu_custom_call.1} parent=19 // pred_check
              _
            $region44: #{tpu_custom_call.1} parent=19 // pred_check_branch
              %117 = sbr.rel (%p101) target = $region46
            $region45: #{tpu_custom_call.1} parent=19 // pred_region
              %s118 = sand.u32 8, 7
            $region46: #{tpu_custom_call.1} parent=19 // pred_fallthru
              _
          $region20: #{tpu_custom_call.1} parent=15 // pred_fallthru
            _
          // Predicated region
          $region21: #{tpu_custom_call.1} parent=15 // pred_check
            %p86 = pneg %p82
          $region22: #{tpu_custom_call.1} parent=15 // pred_check_branch
            %88 = sbr.rel (%p86) target = $region24
          $region23: #{tpu_custom_call.1} parent=15 // pred_region
            %s89 = sshllo.u32 0, 8
            loop: start=0, step=1, limit=1
            $region25: #{tpu_custom_call.1} parent=23 // loop_pre_header
              _
            $region26: #{tpu_custom_call.1} parent=23 // loop_header
              %s91 = sphi 0, %s95
              %p92 = scmp.ge.s32.totalorder %s91, 1
              %s96 = sphi %s79, %s79
              %s97 = sphi [#allocation3], [#allocation3]
            $region27: #{tpu_custom_call.1} parent=23 // loop_header_branch
              %94 = sbr.rel (%p92) target = $region31
            $region28: #{tpu_custom_call.1} parent=23 // loop_body
              %v98 = vld [vmem:[%s96] sm:%s89]
              %99 = vst [vmem:[%s97] sm:%s89] %v98
            $region29: #{tpu_custom_call.1} parent=23 // loop_footer
              %s95 = sadd.s32 1, %s91
            $region30: #{tpu_custom_call.1} parent=23 // loop_footer_branch
              %90 = sbr.rel target = $region26
            $region31: #{tpu_custom_call.1} parent=23 // loop_exit
              _
          $region24: #{tpu_custom_call.1} parent=15 // pred_fallthru
            _
          // Predicated region
          $region47: #{tpu_custom_call.1} parent=15 // pred_check
            _
          $region48: #{tpu_custom_call.1} parent=15 // pred_check_branch
            %121 = sbr.rel (0) target = $region50
          $region49: #{tpu_custom_call.1} parent=15 // pred_region
            %122 = vsyncadd %s80, 128
          $region50: #{tpu_custom_call.1} parent=15 // pred_fallthru
            _
        $region16: #{tpu_custom_call.1} parent=11 // pred_fallthru
          _
        %s123 = smul.u32 %s30, 8
        %s124 = sadd.s32 %s123, %s73
        %s125 = sld [smem:[#allocation7 + %s124]]
        %s126 = scalar_lea.vmem %s2, %s125
        %p128 = scmp.lt.u32.totalorder 1, 8
        %p129 = pneg %p128
        // Predicated region
        $region51: #{tpu_custom_call.1} parent=11 // pred_check
          _
        $region52: #{tpu_custom_call.1} parent=11 // pred_check_branch
          %131 = sbr.rel (%p128) target = $region54
        $region53: #{tpu_custom_call.1} parent=11 // pred_region
          %s146 = sand.u32 1, 7
          %p147 = scmp.eq.s32.totalorder %s146, 0
          %p148 = pneg %p147
          // Predicated region
          $region66: #{tpu_custom_call.1} parent=53 // pred_check
            _
          $region67: #{tpu_custom_call.1} parent=53 // pred_check_branch
            %150 = sbr.rel (%p147) target = $region69
          $region68: #{tpu_custom_call.1} parent=53 // pred_region
            %s151 = sand.u32 1, 7
            %s152 = ssub.s32 1, %s151
            %s153 = scalar_lea.vmem %s126, %s152
            %s154 = ssub.s32 1, %s151
            %s155 = scalar_lea.vmem [#allocation2], %s154
            %s156 = sshllo.u32 0, %s151
            loop: start=0, step=1, limit=1
            $region70: #{tpu_custom_call.1} parent=68 // loop_pre_header
              _
            $region71: #{tpu_custom_call.1} parent=68 // loop_header
              %s158 = sphi 0, %s162
              %p159 = scmp.ge.s32.totalorder %s158, 1
              %s163 = sphi %s153, %s153
              %s164 = sphi %s155, %s155
            $region72: #{tpu_custom_call.1} parent=68 // loop_header_branch
              %161 = sbr.rel (%p159) target = $region76
            $region73: #{tpu_custom_call.1} parent=68 // loop_body
              %v165 = vld [vmem:[%s163] sm:%s156]
              %166 = vst [vmem:[%s164] sm:%s156] %v165
            $region74: #{tpu_custom_call.1} parent=68 // loop_footer
              %s162 = sadd.s32 1, %s158
            $region75: #{tpu_custom_call.1} parent=68 // loop_footer_branch
              %157 = sbr.rel target = $region71
            $region76: #{tpu_custom_call.1} parent=68 // loop_exit
              _
          $region69: #{tpu_custom_call.1} parent=53 // pred_fallthru
            _
        $region54: #{tpu_custom_call.1} parent=11 // pred_fallthru
          _
        // Predicated region
        $region55: #{tpu_custom_call.1} parent=11 // pred_check
          %p132 = pneg %p128
        $region56: #{tpu_custom_call.1} parent=11 // pred_check_branch
          %134 = sbr.rel (%p132) target = $region58
        $region57: #{tpu_custom_call.1} parent=11 // pred_region
          %s135 = sshllo.u32 0, 1
          loop: start=0, step=1, limit=1
          $region59: #{tpu_custom_call.1} parent=57 // loop_pre_header
            _
          $region60: #{tpu_custom_call.1} parent=57 // loop_header
            %s137 = sphi 0, %s141
            %p138 = scmp.ge.s32.totalorder %s137, 1
            %s142 = sphi %s126, %s126
            %s143 = sphi [#allocation2], [#allocation2]
          $region61: #{tpu_custom_call.1} parent=57 // loop_header_branch
            %140 = sbr.rel (%p138) target = $region65
          $region62: #{tpu_custom_call.1} parent=57 // loop_body
            %v144 = vld [vmem:[%s142] sm:%s135]
            %145 = vst [vmem:[%s143] sm:%s135] %v144
          $region63: #{tpu_custom_call.1} parent=57 // loop_footer
            %s141 = sadd.s32 1, %s137
          $region64: #{tpu_custom_call.1} parent=57 // loop_footer_branch
            %136 = sbr.rel target = $region60
          $region65: #{tpu_custom_call.1} parent=57 // loop_exit
            _
        $region58: #{tpu_custom_call.1} parent=11 // pred_fallthru
          _
        // Predicated region
        $region77: #{tpu_custom_call.1} parent=11 // pred_check
          _
        $region78: #{tpu_custom_call.1} parent=11 // pred_check_branch
          %169 = sbr.rel (0) target = $region80
        $region79: #{tpu_custom_call.1} parent=11 // pred_region
          %170 = vsyncadd [#allocation4], 16
        $region80: #{tpu_custom_call.1} parent=11 // pred_fallthru
          _
        %s171 = sadd.s32 %s124, 1
        %s172 = sld [smem:[#allocation7 + %s171]]
        %s173 = scalar_lea.vmem %s2, %s172
        %s174 = scalar_lea.vmem [#allocation2], 1
        %p176 = scmp.lt.u32.totalorder 1, 8
        %p177 = pneg %p176
        // Predicated region
        $region81: #{tpu_custom_call.1} parent=11 // pred_check
          _
        $region82: #{tpu_custom_call.1} parent=11 // pred_check_branch
          %179 = sbr.rel (%p176) target = $region84
        $region83: #{tpu_custom_call.1} parent=11 // pred_region
          %s194 = sand.u32 1, 7
          %p195 = scmp.eq.s32.totalorder %s194, 0
          %p196 = pneg %p195
          // Predicated region
          $region96: #{tpu_custom_call.1} parent=83 // pred_check
            _
          $region97: #{tpu_custom_call.1} parent=83 // pred_check_branch
            %198 = sbr.rel (%p195) target = $region99
          $region98: #{tpu_custom_call.1} parent=83 // pred_region
            %s199 = sand.u32 1, 7
            %s200 = ssub.s32 1, %s199
            %s201 = scalar_lea.vmem %s173, %s200
            %s202 = ssub.s32 1, %s199
            %s203 = scalar_lea.vmem %s174, %s202 [#allocation2]
            %s204 = sshllo.u32 0, %s199
            loop: start=0, step=1, limit=1
            $region100: #{tpu_custom_call.1} parent=98 // loop_pre_header
              _
            $region101: #{tpu_custom_call.1} parent=98 // loop_header
              %s206 = sphi 0, %s210
              %p207 = scmp.ge.s32.totalorder %s206, 1
              %s211 = sphi %s201, %s201
              %s212 = sphi %s203, %s203
            $region102: #{tpu_custom_call.1} parent=98 // loop_header_branch
              %209 = sbr.rel (%p207) target = $region106
            $region103: #{tpu_custom_call.1} parent=98 // loop_body
              %v213 = vld [vmem:[%s211] sm:%s204]
              %214 = vst [vmem:[%s212] sm:%s204] %v213
            $region104: #{tpu_custom_call.1} parent=98 // loop_footer
              %s210 = sadd.s32 1, %s206
            $region105: #{tpu_custom_call.1} parent=98 // loop_footer_branch
              %205 = sbr.rel target = $region101
            $region106: #{tpu_custom_call.1} parent=98 // loop_exit
              _
          $region99: #{tpu_custom_call.1} parent=83 // pred_fallthru
            _
        $region84: #{tpu_custom_call.1} parent=11 // pred_fallthru
          _
        // Predicated region
        $region85: #{tpu_custom_call.1} parent=11 // pred_check
          %p180 = pneg %p176
        $region86: #{tpu_custom_call.1} parent=11 // pred_check_branch
          %182 = sbr.rel (%p180) target = $region88
        $region87: #{tpu_custom_call.1} parent=11 // pred_region
          %s183 = sshllo.u32 0, 1
          loop: start=0, step=1, limit=1
          $region89: #{tpu_custom_call.1} parent=87 // loop_pre_header
            _
          $region90: #{tpu_custom_call.1} parent=87 // loop_header
            %s185 = sphi 0, %s189
            %p186 = scmp.ge.s32.totalorder %s185, 1
            %s190 = sphi %s173, %s173
            %s191 = sphi %s174, %s174
          $region91: #{tpu_custom_call.1} parent=87 // loop_header_branch
            %188 = sbr.rel (%p186) target = $region95
          $region92: #{tpu_custom_call.1} parent=87 // loop_body
            %v192 = vld [vmem:[%s190] sm:%s183]
            %193 = vst [vmem:[%s191] sm:%s183] %v192
          $region93: #{tpu_custom_call.1} parent=87 // loop_footer
            %s189 = sadd.s32 1, %s185
          $region94: #{tpu_custom_call.1} parent=87 // loop_footer_branch
            %184 = sbr.rel target = $region90
          $region95: #{tpu_custom_call.1} parent=87 // loop_exit
            _
        $region88: #{tpu_custom_call.1} parent=11 // pred_fallthru
          _
        // Predicated region
        $region107: #{tpu_custom_call.1} parent=11 // pred_check
          _
        $region108: #{tpu_custom_call.1} parent=11 // pred_check_branch
          %217 = sbr.rel (0) target = $region110
        $region109: #{tpu_custom_call.1} parent=11 // pred_region
          %218 = vsyncadd [#allocation4], 16
        $region110: #{tpu_custom_call.1} parent=11 // pred_fallthru
          _
        %s219 = sadd.s32 %s124, 2
        %s220 = sld [smem:[#allocation7 + %s219]]
        %s221 = scalar_lea.vmem %s2, %s220
        %s222 = scalar_lea.vmem [#allocation2], 2
        %p224 = scmp.lt.u32.totalorder 1, 8
        %p225 = pneg %p224
        // Predicated region
        $region111: #{tpu_custom_call.1} parent=11 // pred_check
          _
        $region112: #{tpu_custom_call.1} parent=11 // pred_check_branch
          %227 = sbr.rel (%p224) target = $region114
        $region113: #{tpu_custom_call.1} parent=11 // pred_region
          %s242 = sand.u32 1, 7
          %p243 = scmp.eq.s32.totalorder %s242, 0
          %p244 = pneg %p243
          // Predicated region
          $region126: #{tpu_custom_call.1} parent=113 // pred_check
            _
          $region127: #{tpu_custom_call.1} parent=113 // pred_check_branch
            %246 = sbr.rel (%p243) target = $region129
          $region128: #{tpu_custom_call.1} parent=113 // pred_region
            %s247 = sand.u32 1, 7
            %s248 = ssub.s32 1, %s247
            %s249 = scalar_lea.vmem %s221, %s248
            %s250 = ssub.s32 1, %s247
            %s251 = scalar_lea.vmem %s222, %s250 [#allocation2]
            %s252 = sshllo.u32 0, %s247
            loop: start=0, step=1, limit=1
            $region130: #{tpu_custom_call.1} parent=128 // loop_pre_header
              _
            $region131: #{tpu_custom_call.1} parent=128 // loop_header
              %s254 = sphi 0, %s258
              %p255 = scmp.ge.s32.totalorder %s254, 1
              %s259 = sphi %s249, %s249
              %s260 = sphi %s251, %s251
            $region132: #{tpu_custom_call.1} parent=128 // loop_header_branch
              %257 = sbr.rel (%p255) target = $region136
            $region133: #{tpu_custom_call.1} parent=128 // loop_body
              %v261 = vld [vmem:[%s259] sm:%s252]
              %262 = vst [vmem:[%s260] sm:%s252] %v261
            $region134: #{tpu_custom_call.1} parent=128 // loop_footer
              %s258 = sadd.s32 1, %s254
            $region135: #{tpu_custom_call.1} parent=128 // loop_footer_branch
              %253 = sbr.rel target = $region131
            $region136: #{tpu_custom_call.1} parent=128 // loop_exit
              _
          $region129: #{tpu_custom_call.1} parent=113 // pred_fallthru
            _
        $region114: #{tpu_custom_call.1} parent=11 // pred_fallthru
          _
        // Predicated region
        $region115: #{tpu_custom_call.1} parent=11 // pred_check
          %p228 = pneg %p224
        $region116: #{tpu_custom_call.1} parent=11 // pred_check_branch
          %230 = sbr.rel (%p228) target = $region118
        $region117: #{tpu_custom_call.1} parent=11 // pred_region
          %s231 = sshllo.u32 0, 1
          loop: start=0, step=1, limit=1
          $region119: #{tpu_custom_call.1} parent=117 // loop_pre_header
            _
          $region120: #{tpu_custom_call.1} parent=117 // loop_header
            %s233 = sphi 0, %s237
            %p234 = scmp.ge.s32.totalorder %s233, 1
            %s238 = sphi %s221, %s221
            %s239 = sphi %s222, %s222
          $region121: #{tpu_custom_call.1} parent=117 // loop_header_branch
            %236 = sbr.rel (%p234) target = $region125
          $region122: #{tpu_custom_call.1} parent=117 // loop_body
            %v240 = vld [vmem:[%s238] sm:%s231]
            %241 = vst [vmem:[%s239] sm:%s231] %v240
          $region123: #{tpu_custom_call.1} parent=117 // loop_footer
            %s237 = sadd.s32 1, %s233
          $region124: #{tpu_custom_call.1} parent=117 // loop_footer_branch
            %232 = sbr.rel target = $region120
          $region125: #{tpu_custom_call.1} parent=117 // loop_exit
            _
        $region118: #{tpu_custom_call.1} parent=11 // pred_fallthru
          _
        // Predicated region
        $region137: #{tpu_custom_call.1} parent=11 // pred_check
          _
        $region138: #{tpu_custom_call.1} parent=11 // pred_check_branch
          %265 = sbr.rel (0) target = $region140
        $region139: #{tpu_custom_call.1} parent=11 // pred_region
          %266 = vsyncadd [#allocation4], 16
        $region140: #{tpu_custom_call.1} parent=11 // pred_fallthru
          _
        %s267 = sadd.s32 %s124, 3
        %s268 = sld [smem:[#allocation7 + %s267]]
        %s269 = scalar_lea.vmem %s2, %s268
        %s270 = scalar_lea.vmem [#allocation2], 3
        %p272 = scmp.lt.u32.totalorder 1, 8
        %p273 = pneg %p272
        // Predicated region
        $region141: #{tpu_custom_call.1} parent=11 // pred_check
          _
        $region142: #{tpu_custom_call.1} parent=11 // pred_check_branch
          %275 = sbr.rel (%p272) target = $region144
        $region143: #{tpu_custom_call.1} parent=11 // pred_region
          %s290 = sand.u32 1, 7
          %p291 = scmp.eq.s32.totalorder %s290, 0
          %p292 = pneg %p291
          // Predicated region
          $region156: #{tpu_custom_call.1} parent=143 // pred_check
            _
          $region157: #{tpu_custom_call.1} parent=143 // pred_check_branch
            %294 = sbr.rel (%p291) target = $region159
          $region158: #{tpu_custom_call.1} parent=143 // pred_region
            %s295 = sand.u32 1, 7
            %s296 = ssub.s32 1, %s295
            %s297 = scalar_lea.vmem %s269, %s296
            %s298 = ssub.s32 1, %s295
            %s299 = scalar_lea.vmem %s270, %s298 [#allocation2]
            %s300 = sshllo.u32 0, %s295
            loop: start=0, step=1, limit=1
            $region160: #{tpu_custom_call.1} parent=158 // loop_pre_header
              _
            $region161: #{tpu_custom_call.1} parent=158 // loop_header
              %s302 = sphi 0, %s306
              %p303 = scmp.ge.s32.totalorder %s302, 1
              %s307 = sphi %s297, %s297
              %s308 = sphi %s299, %s299
            $region162: #{tpu_custom_call.1} parent=158 // loop_header_branch
              %305 = sbr.rel (%p303) target = $region166
            $region163: #{tpu_custom_call.1} parent=158 // loop_body
              %v309 = vld [vmem:[%s307] sm:%s300]
              %310 = vst [vmem:[%s308] sm:%s300] %v309
            $region164: #{tpu_custom_call.1} parent=158 // loop_footer
              %s306 = sadd.s32 1, %s302
            $region165: #{tpu_custom_call.1} parent=158 // loop_footer_branch
              %301 = sbr.rel target = $region161
            $region166: #{tpu_custom_call.1} parent=158 // loop_exit
              _
          $region159: #{tpu_custom_call.1} parent=143 // pred_fallthru
            _
        $region144: #{tpu_custom_call.1} parent=11 // pred_fallthru
          _
        // Predicated region
        $region145: #{tpu_custom_call.1} parent=11 // pred_check
          %p276 = pneg %p272
        $region146: #{tpu_custom_call.1} parent=11 // pred_check_branch
          %278 = sbr.rel (%p276) target = $region148
        $region147: #{tpu_custom_call.1} parent=11 // pred_region
          %s279 = sshllo.u32 0, 1
          loop: start=0, step=1, limit=1
          $region149: #{tpu_custom_call.1} parent=147 // loop_pre_header
            _
          $region150: #{tpu_custom_call.1} parent=147 // loop_header
            %s281 = sphi 0, %s285
            %p282 = scmp.ge.s32.totalorder %s281, 1
            %s286 = sphi %s269, %s269
            %s287 = sphi %s270, %s270
          $region151: #{tpu_custom_call.1} parent=147 // loop_header_branch
            %284 = sbr.rel (%p282) target = $region155
          $region152: #{tpu_custom_call.1} parent=147 // loop_body
            %v288 = vld [vmem:[%s286] sm:%s279]
            %289 = vst [vmem:[%s287] sm:%s279] %v288
          $region153: #{tpu_custom_call.1} parent=147 // loop_footer
            %s285 = sadd.s32 1, %s281
          $region154: #{tpu_custom_call.1} parent=147 // loop_footer_branch
            %280 = sbr.rel target = $region150
          $region155: #{tpu_custom_call.1} parent=147 // loop_exit
            _
        $region148: #{tpu_custom_call.1} parent=11 // pred_fallthru
          _
        // Predicated region
        $region167: #{tpu_custom_call.1} parent=11 // pred_check
          _
        $region168: #{tpu_custom_call.1} parent=11 // pred_check_branch
          %313 = sbr.rel (0) target = $region170
        $region169: #{tpu_custom_call.1} parent=11 // pred_region
          %314 = vsyncadd [#allocation4], 16
        $region170: #{tpu_custom_call.1} parent=11 // pred_fallthru
          _
        %s315 = sadd.s32 %s124, 4
        %s316 = sld [smem:[#allocation7 + %s315]]
        %s317 = scalar_lea.vmem %s2, %s316
        %s318 = scalar_lea.vmem [#allocation2], 4
        %p320 = scmp.lt.u32.totalorder 1, 8
        %p321 = pneg %p320
        // Predicated region
        $region171: #{tpu_custom_call.1} parent=11 // pred_check
          _
        $region172: #{tpu_custom_call.1} parent=11 // pred_check_branch
          %323 = sbr.rel (%p320) target = $region174
        $region173: #{tpu_custom_call.1} parent=11 // pred_region
          %s338 = sand.u32 1, 7
          %p339 = scmp.eq.s32.totalorder %s338, 0
          %p340 = pneg %p339
          // Predicated region
          $region186: #{tpu_custom_call.1} parent=173 // pred_check
            _
          $region187: #{tpu_custom_call.1} parent=173 // pred_check_branch
            %342 = sbr.rel (%p339) target = $region189
          $region188: #{tpu_custom_call.1} parent=173 // pred_region
            %s343 = sand.u32 1, 7
            %s344 = ssub.s32 1, %s343
            %s345 = scalar_lea.vmem %s317, %s344
            %s346 = ssub.s32 1, %s343
            %s347 = scalar_lea.vmem %s318, %s346 [#allocation2]
            %s348 = sshllo.u32 0, %s343
            loop: start=0, step=1, limit=1
            $region190: #{tpu_custom_call.1} parent=188 // loop_pre_header
              _
            $region191: #{tpu_custom_call.1} parent=188 // loop_header
              %s350 = sphi 0, %s354
              %p351 = scmp.ge.s32.totalorder %s350, 1
              %s355 = sphi %s345, %s345
              %s356 = sphi %s347, %s347
            $region192: #{tpu_custom_call.1} parent=188 // loop_header_branch
              %353 = sbr.rel (%p351) target = $region196
            $region193: #{tpu_custom_call.1} parent=188 // loop_body
              %v357 = vld [vmem:[%s355] sm:%s348]
              %358 = vst [vmem:[%s356] sm:%s348] %v357
            $region194: #{tpu_custom_call.1} parent=188 // loop_footer
              %s354 = sadd.s32 1, %s350
            $region195: #{tpu_custom_call.1} parent=188 // loop_footer_branch
              %349 = sbr.rel target = $region191
            $region196: #{tpu_custom_call.1} parent=188 // loop_exit
              _
          $region189: #{tpu_custom_call.1} parent=173 // pred_fallthru
            _
        $region174: #{tpu_custom_call.1} parent=11 // pred_fallthru
          _
        // Predicated region
        $region175: #{tpu_custom_call.1} parent=11 // pred_check
          %p324 = pneg %p320
        $region176: #{tpu_custom_call.1} parent=11 // pred_check_branch
          %326 = sbr.rel (%p324) target = $region178
        $region177: #{tpu_custom_call.1} parent=11 // pred_region
          %s327 = sshllo.u32 0, 1
          loop: start=0, step=1, limit=1
          $region179: #{tpu_custom_call.1} parent=177 // loop_pre_header
            _
          $region180: #{tpu_custom_call.1} parent=177 // loop_header
            %s329 = sphi 0, %s333
            %p330 = scmp.ge.s32.totalorder %s329, 1
            %s334 = sphi %s317, %s317
            %s335 = sphi %s318, %s318
          $region181: #{tpu_custom_call.1} parent=177 // loop_header_branch
            %332 = sbr.rel (%p330) target = $region185
          $region182: #{tpu_custom_call.1} parent=177 // loop_body
            %v336 = vld [vmem:[%s334] sm:%s327]
            %337 = vst [vmem:[%s335] sm:%s327] %v336
          $region183: #{tpu_custom_call.1} parent=177 // loop_footer
            %s333 = sadd.s32 1, %s329
          $region184: #{tpu_custom_call.1} parent=177 // loop_footer_branch
            %328 = sbr.rel target = $region180
          $region185: #{tpu_custom_call.1} parent=177 // loop_exit
            _
        $region178: #{tpu_custom_call.1} parent=11 // pred_fallthru
          _
        // Predicated region
        $region197: #{tpu_custom_call.1} parent=11 // pred_check
          _
        $region198: #{tpu_custom_call.1} parent=11 // pred_check_branch
          %361 = sbr.rel (0) target = $region200
        $region199: #{tpu_custom_call.1} parent=11 // pred_region
          %362 = vsyncadd [#allocation4], 16
        $region200: #{tpu_custom_call.1} parent=11 // pred_fallthru
          _
        %s363 = sadd.s32 %s124, 5
        %s364 = sld [smem:[#allocation7 + %s363]]
        %s365 = scalar_lea.vmem %s2, %s364
        %s366 = scalar_lea.vmem [#allocation2], 5
        %p368 = scmp.lt.u32.totalorder 1, 8
        %p369 = pneg %p368
        // Predicated region
        $region201: #{tpu_custom_call.1} parent=11 // pred_check
          _
        $region202: #{tpu_custom_call.1} parent=11 // pred_check_branch
          %371 = sbr.rel (%p368) target = $region204
        $region203: #{tpu_custom_call.1} parent=11 // pred_region
          %s386 = sand.u32 1, 7
          %p387 = scmp.eq.s32.totalorder %s386, 0
          %p388 = pneg %p387
          // Predicated region
          $region216: #{tpu_custom_call.1} parent=203 // pred_check
            _
          $region217: #{tpu_custom_call.1} parent=203 // pred_check_branch
            %390 = sbr.rel (%p387) target = $region219
          $region218: #{tpu_custom_call.1} parent=203 // pred_region
            %s391 = sand.u32 1, 7
            %s392 = ssub.s32 1, %s391
            %s393 = scalar_lea.vmem %s365, %s392
            %s394 = ssub.s32 1, %s391
            %s395 = scalar_lea.vmem %s366, %s394 [#allocation2]
            %s396 = sshllo.u32 0, %s391
            loop: start=0, step=1, limit=1
            $region220: #{tpu_custom_call.1} parent=218 // loop_pre_header
              _
            $region221: #{tpu_custom_call.1} parent=218 // loop_header
              %s398 = sphi 0, %s402
              %p399 = scmp.ge.s32.totalorder %s398, 1
              %s403 = sphi %s393, %s393
              %s404 = sphi %s395, %s395
            $region222: #{tpu_custom_call.1} parent=218 // loop_header_branch
              %401 = sbr.rel (%p399) target = $region226
            $region223: #{tpu_custom_call.1} parent=218 // loop_body
              %v405 = vld [vmem:[%s403] sm:%s396]
              %406 = vst [vmem:[%s404] sm:%s396] %v405
            $region224: #{tpu_custom_call.1} parent=218 // loop_footer
              %s402 = sadd.s32 1, %s398
            $region225: #{tpu_custom_call.1} parent=218 // loop_footer_branch
              %397 = sbr.rel target = $region221
            $region226: #{tpu_custom_call.1} parent=218 // loop_exit
              _
          $region219: #{tpu_custom_call.1} parent=203 // pred_fallthru
            _
        $region204: #{tpu_custom_call.1} parent=11 // pred_fallthru
          _
        // Predicated region
        $region205: #{tpu_custom_call.1} parent=11 // pred_check
          %p372 = pneg %p368
        $region206: #{tpu_custom_call.1} parent=11 // pred_check_branch
          %374 = sbr.rel (%p372) target = $region208
        $region207: #{tpu_custom_call.1} parent=11 // pred_region
          %s375 = sshllo.u32 0, 1
          loop: start=0, step=1, limit=1
          $region209: #{tpu_custom_call.1} parent=207 // loop_pre_header
            _
          $region210: #{tpu_custom_call.1} parent=207 // loop_header
            %s377 = sphi 0, %s381
            %p378 = scmp.ge.s32.totalorder %s377, 1
            %s382 = sphi %s365, %s365
            %s383 = sphi %s366, %s366
          $region211: #{tpu_custom_call.1} parent=207 // loop_header_branch
            %380 = sbr.rel (%p378) target = $region215
          $region212: #{tpu_custom_call.1} parent=207 // loop_body
            %v384 = vld [vmem:[%s382] sm:%s375]
            %385 = vst [vmem:[%s383] sm:%s375] %v384
          $region213: #{tpu_custom_call.1} parent=207 // loop_footer
            %s381 = sadd.s32 1, %s377
          $region214: #{tpu_custom_call.1} parent=207 // loop_footer_branch
            %376 = sbr.rel target = $region210
          $region215: #{tpu_custom_call.1} parent=207 // loop_exit
            _
        $region208: #{tpu_custom_call.1} parent=11 // pred_fallthru
          _
        // Predicated region
        $region227: #{tpu_custom_call.1} parent=11 // pred_check
          _
        $region228: #{tpu_custom_call.1} parent=11 // pred_check_branch
          %409 = sbr.rel (0) target = $region230
        $region229: #{tpu_custom_call.1} parent=11 // pred_region
          %410 = vsyncadd [#allocation4], 16
        $region230: #{tpu_custom_call.1} parent=11 // pred_fallthru
          _
        %s411 = sadd.s32 %s124, 6
        %s412 = sld [smem:[#allocation7 + %s411]]
        %s413 = scalar_lea.vmem %s2, %s412
        %s414 = scalar_lea.vmem [#allocation2], 6
        %p416 = scmp.lt.u32.totalorder 1, 8
        %p417 = pneg %p416
        // Predicated region
        $region231: #{tpu_custom_call.1} parent=11 // pred_check
          _
        $region232: #{tpu_custom_call.1} parent=11 // pred_check_branch
          %419 = sbr.rel (%p416) target = $region234
        $region233: #{tpu_custom_call.1} parent=11 // pred_region
          %s434 = sand.u32 1, 7
          %p435 = scmp.eq.s32.totalorder %s434, 0
          %p436 = pneg %p435
          // Predicated region
          $region246: #{tpu_custom_call.1} parent=233 // pred_check
            _
          $region247: #{tpu_custom_call.1} parent=233 // pred_check_branch
            %438 = sbr.rel (%p435) target = $region249
          $region248: #{tpu_custom_call.1} parent=233 // pred_region
            %s439 = sand.u32 1, 7
            %s440 = ssub.s32 1, %s439
            %s441 = scalar_lea.vmem %s413, %s440
            %s442 = ssub.s32 1, %s439
            %s443 = scalar_lea.vmem %s414, %s442 [#allocation2]
            %s444 = sshllo.u32 0, %s439
            loop: start=0, step=1, limit=1
            $region250: #{tpu_custom_call.1} parent=248 // loop_pre_header
              _
            $region251: #{tpu_custom_call.1} parent=248 // loop_header
              %s446 = sphi 0, %s450
              %p447 = scmp.ge.s32.totalorder %s446, 1
              %s451 = sphi %s441, %s441
              %s452 = sphi %s443, %s443
            $region252: #{tpu_custom_call.1} parent=248 // loop_header_branch
              %449 = sbr.rel (%p447) target = $region256
            $region253: #{tpu_custom_call.1} parent=248 // loop_body
              %v453 = vld [vmem:[%s451] sm:%s444]
              %454 = vst [vmem:[%s452] sm:%s444] %v453
            $region254: #{tpu_custom_call.1} parent=248 // loop_footer
              %s450 = sadd.s32 1, %s446
            $region255: #{tpu_custom_call.1} parent=248 // loop_footer_branch
              %445 = sbr.rel target = $region251
            $region256: #{tpu_custom_call.1} parent=248 // loop_exit
              _
          $region249: #{tpu_custom_call.1} parent=233 // pred_fallthru
            _
        $region234: #{tpu_custom_call.1} parent=11 // pred_fallthru
          _
        // Predicated region
        $region235: #{tpu_custom_call.1} parent=11 // pred_check
          %p420 = pneg %p416
        $region236: #{tpu_custom_call.1} parent=11 // pred_check_branch
          %422 = sbr.rel (%p420) target = $region238
        $region237: #{tpu_custom_call.1} parent=11 // pred_region
          %s423 = sshllo.u32 0, 1
          loop: start=0, step=1, limit=1
          $region239: #{tpu_custom_call.1} parent=237 // loop_pre_header
            _
          $region240: #{tpu_custom_call.1} parent=237 // loop_header
            %s425 = sphi 0, %s429
            %p426 = scmp.ge.s32.totalorder %s425, 1
            %s430 = sphi %s413, %s413
            %s431 = sphi %s414, %s414
          $region241: #{tpu_custom_call.1} parent=237 // loop_header_branch
            %428 = sbr.rel (%p426) target = $region245
          $region242: #{tpu_custom_call.1} parent=237 // loop_body
            %v432 = vld [vmem:[%s430] sm:%s423]
            %433 = vst [vmem:[%s431] sm:%s423] %v432
          $region243: #{tpu_custom_call.1} parent=237 // loop_footer
            %s429 = sadd.s32 1, %s425
          $region244: #{tpu_custom_call.1} parent=237 // loop_footer_branch
            %424 = sbr.rel target = $region240
          $region245: #{tpu_custom_call.1} parent=237 // loop_exit
            _
        $region238: #{tpu_custom_call.1} parent=11 // pred_fallthru
          _
        // Predicated region
        $region257: #{tpu_custom_call.1} parent=11 // pred_check
          _
        $region258: #{tpu_custom_call.1} parent=11 // pred_check_branch
          %457 = sbr.rel (0) target = $region260
        $region259: #{tpu_custom_call.1} parent=11 // pred_region
          %458 = vsyncadd [#allocation4], 16
        $region260: #{tpu_custom_call.1} parent=11 // pred_fallthru
          _
        %s459 = sadd.s32 %s124, 7
        %s460 = sld [smem:[#allocation7 + %s459]]
        %s461 = scalar_lea.vmem %s2, %s460
        %s462 = scalar_lea.vmem [#allocation2], 7
        %p464 = scmp.lt.u32.totalorder 1, 8
        %p465 = pneg %p464
        // Predicated region
        $region261: #{tpu_custom_call.1} parent=11 // pred_check
          _
        $region262: #{tpu_custom_call.1} parent=11 // pred_check_branch
          %467 = sbr.rel (%p464) target = $region264
        $region263: #{tpu_custom_call.1} parent=11 // pred_region
          %s482 = sand.u32 1, 7
          %p483 = scmp.eq.s32.totalorder %s482, 0
          %p484 = pneg %p483
          // Predicated region
          $region276: #{tpu_custom_call.1} parent=263 // pred_check
            _
          $region277: #{tpu_custom_call.1} parent=263 // pred_check_branch
            %486 = sbr.rel (%p483) target = $region279
          $region278: #{tpu_custom_call.1} parent=263 // pred_region
            %s487 = sand.u32 1, 7
            %s488 = ssub.s32 1, %s487
            %s489 = scalar_lea.vmem %s461, %s488
            %s490 = ssub.s32 1, %s487
            %s491 = scalar_lea.vmem %s462, %s490 [#allocation2]
            %s492 = sshllo.u32 0, %s487
            loop: start=0, step=1, limit=1
            $region280: #{tpu_custom_call.1} parent=278 // loop_pre_header
              _
            $region281: #{tpu_custom_call.1} parent=278 // loop_header
              %s494 = sphi 0, %s498
              %p495 = scmp.ge.s32.totalorder %s494, 1
              %s499 = sphi %s489, %s489
              %s500 = sphi %s491, %s491
            $region282: #{tpu_custom_call.1} parent=278 // loop_header_branch
              %497 = sbr.rel (%p495) target = $region286
            $region283: #{tpu_custom_call.1} parent=278 // loop_body
              %v501 = vld [vmem:[%s499] sm:%s492]
              %502 = vst [vmem:[%s500] sm:%s492] %v501
            $region284: #{tpu_custom_call.1} parent=278 // loop_footer
              %s498 = sadd.s32 1, %s494
            $region285: #{tpu_custom_call.1} parent=278 // loop_footer_branch
              %493 = sbr.rel target = $region281
            $region286: #{tpu_custom_call.1} parent=278 // loop_exit
              _
          $region279: #{tpu_custom_call.1} parent=263 // pred_fallthru
            _
        $region264: #{tpu_custom_call.1} parent=11 // pred_fallthru
          _
        // Predicated region
        $region265: #{tpu_custom_call.1} parent=11 // pred_check
          %p468 = pneg %p464
        $region266: #{tpu_custom_call.1} parent=11 // pred_check_branch
          %470 = sbr.rel (%p468) target = $region268
        $region267: #{tpu_custom_call.1} parent=11 // pred_region
          %s471 = sshllo.u32 0, 1
          loop: start=0, step=1, limit=1
          $region269: #{tpu_custom_call.1} parent=267 // loop_pre_header
            _
          $region270: #{tpu_custom_call.1} parent=267 // loop_header
            %s473 = sphi 0, %s477
            %p474 = scmp.ge.s32.totalorder %s473, 1
            %s478 = sphi %s461, %s461
            %s479 = sphi %s462, %s462
          $region271: #{tpu_custom_call.1} parent=267 // loop_header_branch
            %476 = sbr.rel (%p474) target = $region275
          $region272: #{tpu_custom_call.1} parent=267 // loop_body
            %v480 = vld [vmem:[%s478] sm:%s471]
            %481 = vst [vmem:[%s479] sm:%s471] %v480
          $region273: #{tpu_custom_call.1} parent=267 // loop_footer
            %s477 = sadd.s32 1, %s473
          $region274: #{tpu_custom_call.1} parent=267 // loop_footer_branch
            %472 = sbr.rel target = $region270
          $region275: #{tpu_custom_call.1} parent=267 // loop_exit
            _
        $region268: #{tpu_custom_call.1} parent=11 // pred_fallthru
          _
        // Predicated region
        $region287: #{tpu_custom_call.1} parent=11 // pred_check
          _
        $region288: #{tpu_custom_call.1} parent=11 // pred_check_branch
          %505 = sbr.rel (0) target = $region290
        $region289: #{tpu_custom_call.1} parent=11 // pred_region
          %506 = vsyncadd [#allocation4], 16
        $region290: #{tpu_custom_call.1} parent=11 // pred_fallthru
          _
        %s507 = smul.u32 8, 1
        %s508 = sshll.u32 %s507, 4
        %509 = dma.done [#allocation4], %s508
        // Predicated region
        $region291: #{tpu_custom_call.1} parent=11 // pred_check
          %p510 = pneg %p75
        $region292: #{tpu_custom_call.1} parent=11 // pred_check_branch
          %512 = sbr.rel (%p510) target = $region294
        $region293: #{tpu_custom_call.1} parent=11 // pred_region
          %s513 = scalar_lea.sflag [#allocation4], 1
          %s514 = sshll.u32 %s507, 4
          %515 = dma.done %s513, %s514
        $region294: #{tpu_custom_call.1} parent=11 // pred_fallthru
          _
        %v516 = vld [vmem:[#allocation2] sm:$0xff]
        %v517 = vld [vmem:[#allocation3] sm:$0xff]
        %v518 = vadd.f32 %v516, %v517
        %vm519 = vcmask 261120
        %520 = vst.msk [vmem:[%s71] sm:$0xff] %vm519, %v518
        %s521 = sand.u32 %s44, 1
        %s522 = scalar_lea.sflag [#allocation9], %s521
        %s523 = sand.u32 %s44, 1
        %s524 = smul.addr %s523, 8
        %s525 = scalar_lea.vmem [#allocation8], %s524
        // Predicated region
        $region295: #{tpu_custom_call.1} parent=11 // pred_check
          %p526 = pneg %p50
        $region296: #{tpu_custom_call.1} parent=11 // pred_check_branch
          %528 = sbr.rel (%p526) target = $region298
        $region297: #{tpu_custom_call.1} parent=11 // pred_region
          %s530 = ssub.s32 128, 128
          %531 = vsyncadd %s522, %s530
          %s532 = sadd.s32 %s29, %s30
          %s533 = smul.addr %s532, 128
          %s534 = scalar_lea.hbm %s4, %s533
          %s536 = sshll.u32 %s525, 4
          %s537 = int_to_ptr.vmem [resolvable:$true] %s536
          %539 = dma.vmem_to_hbm [thread:$0]  %s537, 128, %s534, %s522
        $region298: #{tpu_custom_call.1} parent=11 // pred_fallthru
          _
      $region12: #{tpu_custom_call.1} parent=5 // pred_fallthru
        _
      %p540 = scmp.le.s32.totalorder 1, %s23
      // Predicated region
      $region299: #{tpu_custom_call.1} parent=5 // pred_check
        %p541 = pneg %p540
      $region300: #{tpu_custom_call.1} parent=5 // pred_check_branch
        %543 = sbr.rel (%p541) target = $region302
      $region301: #{tpu_custom_call.1} parent=5 // pred_region
        %s544 = ssub.s32 %s23, 1
        // Predicated region
        $region303: #{tpu_custom_call.1} parent=301 // pred_check
          %p545 = pneg %p56
        $region304: #{tpu_custom_call.1} parent=301 // pred_check_branch
          %547 = sbr.rel (%p545) target = $region306
        $region305: #{tpu_custom_call.1} parent=301 // pred_region
          %s548 = sand.u32 %s47, 1
          %s549 = scalar_lea.sflag [#allocation9], %s548
          %s550 = sand.u32 %s47, 1
          %s551 = smul.addr %s550, 8
          %s552 = scalar_lea.vmem [#allocation8], %s551
          %553 = dma.done %s549, 128
        $region306: #{tpu_custom_call.1} parent=301 // pred_fallthru
          _
      $region302: #{tpu_custom_call.1} parent=5 // pred_fallthru
        _
    $region6: #{tpu_custom_call.1} parent=1 // loop_footer
      %s27 = sadd.s32 1, %s23
    $region7: #{tpu_custom_call.1} parent=1 // loop_footer_branch
      %22 = sbr.rel target = $region3
    $region8: #{tpu_custom_call.1} parent=1 // loop_exit
      _
    %554 = vsyncpa [#allocation9], 1
    %s555 = scalar_lea.sflag [#allocation9], 1
    %556 = vsyncpa %s555, 1
  %557 = vsyncmov [#allocation4]
  %s558 = vpop.sfrf %557
  %p559 = scmp.eq.s32.totalorder %s558, 0
  %p560 = pneg %p559
  %562 = shalt.err (%p560)
  %s563 = scalar_lea.sflag [#allocation4], 1
  %564 = vsyncmov %s563
  %s565 = vpop.sfrf %564
  %p566 = scmp.eq.s32.totalorder %s565, 0
  %p567 = pneg %p566
  %569 = shalt.err (%p567)

</llo_original>
